<compile_context>
chip_gen: v7x
topology: tpu7x:2x2x1
jax: 0.10.0
libtpu: 0.0.40
codegen_flags: <defaults>
</compile_context>

<pallas_src>
import functools

import jax
import jax.numpy as jnp
from jax.experimental import pallas as pl
from jax.experimental.pallas import tpu as pltpu


def _round_up(x, m):
    return ((x + m - 1) // m) * m


# ---------------------------------------------------------------------------
# TPU-generation-aware knobs (decided once per process).
# ---------------------------------------------------------------------------
def _device_kind():
    try:
        return jax.devices()[0].device_kind.lower()
    except Exception:
        return ""


_KIND = _device_kind()
_IS_V5 = "v5" in _KIND
_IS_V7 = "v7" in _KIND

# MXU-native lane alignment for the hidden dims (v5e MXU is 128-wide, v6e/v7x 256).
_MXU_ALIGN = 128 if _IS_V5 else 256
_HEAD_ALIGN = 128                      # lane-dense output head
# Batch-tile cap: v7x has only 64 MiB VMEM per TC.
_BM_CAP = 256 if _IS_V7 else 512
# Scoped-VMEM limit we request, and the fraction we budget for tiles + weights.
_VMEM_LIMIT = (32 << 20) if _IS_V7 else (64 << 20)
_VMEM_BUDGET = int(0.6 * _VMEM_LIMIT)
# bf16 VALU exists on v6e/v7x; v5e's VPU/EUP are f32-only.
_MLP_ELEM_DTYPE = jnp.float32 if _IS_V5 else jnp.bfloat16


def _resident_spec(shape):
    """Constant-index parameter: DMA'd once, single-buffered in VMEM."""
    try:
        return pl.BlockSpec(shape, lambda i: (0, 0),
                            pipeline_mode=pl.Buffered(buffer_count=1))
    except Exception:                   # older jax without pipeline_mode support
        return pl.BlockSpec(shape, lambda i: (0, 0))


# ---------------------------------------------------------------------------
# Kernel
# ---------------------------------------------------------------------------
def _actor_kernel(obs_ref, w_tr_ref, tvec_ref, w1_ref, w2_ref, w3_ref, bvec_ref,
                  out_ref, *, feature_dim, elem_dtype):
    f32 = jnp.float32
    bf16 = jnp.bfloat16

    # ---- trunk: Linear(repr_dim -> feature_dim) on the MXU, f32 accumulate ----
    x = obs_ref[...].astype(bf16)                              # [BM, R]
    h = jnp.dot(x, w_tr_ref[...], preferred_element_type=f32)
    h = h + tvec_ref[0:1, :]                                   # + b_tr  [BM, F_pad]

    # ---- LayerNorm over the *true* feature_dim (masked, centered two-pass) ----
    lane = jax.lax.broadcasted_iota(jnp.int32, h.shape, 1)
    valid = lane < feature_dim                                 # padded lanes excluded
    inv_f = 1.0 / feature_dim
    mu = jnp.sum(h, axis=-1, keepdims=True) * inv_f            # padded lanes hold 0
    hc = jnp.where(valid, h - mu, 0.0)
    var = jnp.sum(hc * hc, axis=-1, keepdims=True) * inv_f
    h = hc * jax.lax.rsqrt(var + 1e-5)                         # eps = PyTorch default
    h = h * tvec_ref[1:2, :] + tvec_ref[2:3, :]                # ln_g, ln_b (0 in padding)

    # ---- Tanh (EUP) ----
    t = jnp.tanh(h)

    # ---- policy MLP: Linear -> ReLU -> Linear -> ReLU -> Linear ----
    H = w1_ref.shape[1]
    A = w3_ref.shape[1]
    b1 = bvec_ref[0:1, :H].astype(elem_dtype)
    b2 = bvec_ref[1:2, :H].astype(elem_dtype)
    b3 = bvec_ref[2:3, :A]                                     # final bias stays f32

    z = jnp.dot(t.astype(bf16), w1_ref[...], preferred_element_type=f32)
    z = jnp.maximum(z.astype(elem_dtype) + b1, 0.0).astype(bf16)
    z = jnp.dot(z, w2_ref[...], preferred_element_type=f32)
    z = jnp.maximum(z.astype(elem_dtype) + b2, 0.0).astype(bf16)
    logits = jnp.dot(z, w3_ref[...], preferred_element_type=f32) + b3

    # Lane-dense bf16 store; wrapper slices back to [:, :n_actions].
    out_ref[...] = logits.astype(out_ref.dtype)


# ---------------------------------------------------------------------------
# One-time parameter preprocessing (bf16 casts + lane padding + packing)
# ---------------------------------------------------------------------------
def prepare_params(params):
    repr_dim, feature_dim = params["w_tr"].shape
    hidden_dim = params["w1"].shape[1]
    n_actions = params["w3"].shape[1]

    f_pad = _round_up(feature_dim, _MXU_ALIGN)
    h_pad = _round_up(hidden_dim, _MXU_ALIGN)
    a_pad = max(_HEAD_ALIGN, _round_up(n_actions, _HEAD_ALIGN))

    def pad2(a, rows, cols, dtype):
        out = jnp.zeros((rows, cols), dtype)
        return out.at[:a.shape[0], :a.shape[1]].set(a.astype(dtype))

    w_tr = pad2(params["w_tr"], repr_dim, f_pad, jnp.bfloat16)
    w1 = pad2(params["w1"], f_pad, h_pad, jnp.bfloat16)
    w2 = pad2(params["w2"], h_pad, h_pad, jnp.bfloat16)
    w3 = pad2(params["w3"], h_pad, a_pad, jnp.bfloat16)

    # Packed trunk vectors: rows = [b_tr, ln_g, ln_b]; padded lanes stay 0 so
    # the padded features come out of the trunk exactly zero.
    trunk_vec = jnp.zeros((3, f_pad), jnp.float32)
    trunk_vec = trunk_vec.at[0, :feature_dim].set(params["b_tr"].reshape(-1))
    trunk_vec = trunk_vec.at[1, :feature_dim].set(params["ln_g"].reshape(-1))
    trunk_vec = trunk_vec.at[2, :feature_dim].set(params["ln_b"].reshape(-1))

    # Packed MLP biases: rows = [b1, b2, b3], padded to the widest layer.
    w = max(h_pad, a_pad)
    bias_vec = jnp.zeros((3, w), jnp.float32)
    bias_vec = bias_vec.at[0, :hidden_dim].set(params["b1"].reshape(-1))
    bias_vec = bias_vec.at[1, :hidden_dim].set(params["b2"].reshape(-1))
    bias_vec = bias_vec.at[2, :n_actions].set(params["b3"].reshape(-1))

    arrays = dict(w_tr=w_tr, trunk_vec=trunk_vec, w1=w1, w2=w2, w3=w3,
                  bias_vec=bias_vec)
    dims = dict(repr_dim=repr_dim, feature_dim=feature_dim,
                hidden_dim=hidden_dim, n_actions=n_actions,
                f_pad=f_pad, h_pad=h_pad, a_pad=a_pad)
    return {"arrays": jax.tree_util.tree_map(jnp.asarray, arrays), "dims": dims}


# ---------------------------------------------------------------------------
# Forward
# ---------------------------------------------------------------------------
@functools.partial(jax.jit, static_argnames=("feature_dim", "n_actions"))
def _forward_impl(obs, w_tr, trunk_vec, w1, w2, w3, bias_vec, *,
                  feature_dim, n_actions):
    B, repr_dim = obs.shape
    f_pad = w_tr.shape[1]
    h_pad = w1.shape[1]
    a_pad = w3.shape[1]

    # ---- batch tile sized from an explicit VMEM budget ----------------------
    weight_bytes = sum(int(a.size) * a.dtype.itemsize
                       for a in (w_tr, trunk_vec, w1, w2, w3, bias_vec))
    per_row = (2 * repr_dim * 4                       # obs tile, double-buffered f32
               + 2 * a_pad * 2                        # logits tile, double-buffered bf16
               + 2 * 4 * (f_pad + 2 * h_pad + a_pad)) # f32 activation temps (2x margin)
    rows_cap = max(8, (_VMEM_BUDGET - weight_bytes) // per_row)
    bm_cap = max(8, min(_BM_CAP, (rows_cap // 8) * 8))

    n_tiles = pl.cdiv(B, bm_cap)
    if _IS_V7 and B >= 32:
        n_tiles = max(n_tiles, 2)                     # keep both v7x TCs busy
    if n_tiles == 1:
        bm = _round_up(B, 8)                          # block == full padded array
    else:
        bm = _round_up(pl.cdiv(B, n_tiles), 16)       # even tiling, bf16-friendly
    b_pad = _round_up(B, bm)
    if b_pad != B:
        obs = jnp.pad(obs, ((0, b_pad - B), (0, 0)))
    grid = (b_pad // bm,)

    operands = (obs, w_tr, trunk_vec, w1, w2, w3, bias_vec)
    in_specs = [pl.BlockSpec((bm, repr_dim), lambda i: (i, 0))]
    in_specs += [_resident_spec(op.shape) for op in operands[1:]]
    out_spec = pl.BlockSpec((bm, a_pad), lambda i: (i, 0))

    flops = 2 * b_pad * (repr_dim * f_pad + f_pad * h_pad
                         + h_pad * h_pad + h_pad * a_pad)
    bytes_accessed = weight_bytes + b_pad * repr_dim * 4 + b_pad * a_pad * 2
    cost = pl.CostEstimate(flops=flops,
                           transcendentals=b_pad * (f_pad + 1),  # tanh + rsqrt
                           bytes_accessed=bytes_accessed)

    kernel = functools.partial(_actor_kernel,
                               feature_dim=feature_dim,
                               elem_dtype=_MLP_ELEM_DTYPE)

    logits_padded = pl.pallas_call(
        kernel,
        out_shape=jax.ShapeDtypeStruct((b_pad, a_pad), jnp.bfloat16),
        grid=grid,
        in_specs=in_specs,
        out_specs=out_spec,
        compiler_params=pltpu.CompilerParams(
            dimension_semantics=("parallel",),        # shards batch tiles on v7x TCs
            vmem_limit_bytes=_VMEM_LIMIT),
        cost_estimate=cost,
    )(*operands)

    # Padded head lanes are NOT valid logits; always slice before softmax.
    return logits_padded[:B, :n_actions].astype(jnp.float32)


def discrete_actor_forward(obs, prep):
    """forward(obs, return_action=True): returns action logits [B, n_actions]."""
    a = prep["arrays"]
    d = prep["dims"]
    return _forward_impl(obs, a["w_tr"], a["trunk_vec"], a["w1"], a["w2"],
                         a["w3"], a["bias_vec"],
                         feature_dim=d["feature_dim"],
                         n_actions=d["n_actions"])


# ---------------------------------------------------------------------------
# Synthetic init + pure-JAX reference
# ---------------------------------------------------------------------------
def init_params(key, repr_dim, n_actions, feature_dim, hidden_dim):
    """Deterministic synthetic init (mirrors shapes created in __init__)."""
    ks = jax.random.split(key, 4)

    def linear(kw, fan_in, fan_out):
        w = jax.random.normal(kw, (fan_in, fan_out), jnp.float32) / jnp.sqrt(fan_in)
        b = jnp.zeros((1, fan_out), jnp.float32)
        return w, b

    w_tr, b_tr = linear(ks[0], repr_dim, feature_dim)
    w1, b1 = linear(ks[1], feature_dim, hidden_dim)
    w2, b2 = linear(ks[2], hidden_dim, hidden_dim)
    w3, b3 = linear(ks[3], hidden_dim, n_actions)
    return {
        "w_tr": w_tr, "b_tr": b_tr,
        "ln_g": jnp.ones((1, feature_dim), jnp.float32),
        "ln_b": jnp.zeros((1, feature_dim), jnp.float32),
        "w1": w1, "b1": b1, "w2": w2, "b2": b2, "w3": w3, "b3": b3,
    }


def _reference_forward(obs, p):
    """Pure-JAX reference mirroring the kernel's bf16-matmul / f32 norm mix."""
    bf = lambda a: a.astype(jnp.bfloat16)
    f32 = jnp.float32
    h = jnp.dot(bf(obs), bf(p["w_tr"]), preferred_element_type=f32) + p["b_tr"]
    mu = h.mean(-1, keepdims=True)
    var = ((h - mu) ** 2).mean(-1, keepdims=True)
    h = (h - mu) / jnp.sqrt(var + 1e-5) * p["ln_g"] + p["ln_b"]
    t = jnp.tanh(h)
    z = jnp.maximum(jnp.dot(bf(t), bf(p["w1"]), preferred_element_type=f32) + p["b1"], 0.0)
    z = jnp.maximum(jnp.dot(bf(z), bf(p["w2"]), preferred_element_type=f32) + p["b2"], 0.0)
    return jnp.dot(bf(z), bf(p["w3"]), preferred_element_type=f32) + p["b3"]


if __name__ == "__main__":
    # Small shapes consistent with the module's forward.
    B, repr_dim, feature_dim, hidden_dim, n_actions = 8, 32, 32, 32, 8

    key = jax.random.PRNGKey(0)
    k_obs, k_par = jax.random.split(key)
    obs = jax.random.normal(k_obs, (B, repr_dim), jnp.float32)
    params = init_params(k_par, repr_dim, n_actions, feature_dim, hidden_dim)

    # One-time preprocessing (bf16 cast, lane padding, bias packing).
    prep = prepare_params(params)

    logits = discrete_actor_forward(obs, prep)
    logits = jax.block_until_ready(logits)
    assert logits.shape == (B, n_actions)

    # dist = utils.MultiNomial(actions) -> categorical parameterized by logits.
    probs = jax.nn.softmax(logits, axis=-1)
    probs = jax.block_until_ready(probs)

    # Sanity check against pure-JAX reference (bf16 matmuls / bf16 logits ->
    # loose tolerance).
    ref = _reference_forward(obs, params)
    assert jnp.allclose(logits, ref, atol=3e-2, rtol=3e-2), "mismatch vs reference"

    print("KERNEL_OK")
</pallas_src>

<mosaic_0001>
module attributes {stable_mosaic.version = 11 : i64} {
  func.func @_actor_kernel(%arg0: i32, %arg1: memref<8x32xf32, #tpu.memory_space<vmem>>, %arg2: memref<32x256xbf16, #tpu.memory_space<vmem>>, %arg3: memref<3x256xf32, #tpu.memory_space<vmem>>, %arg4: memref<256x256xbf16, #tpu.memory_space<vmem>>, %arg5: memref<256x256xbf16, #tpu.memory_space<vmem>>, %arg6: memref<256x128xbf16, #tpu.memory_space<vmem>>, %arg7: memref<3x256xf32, #tpu.memory_space<vmem>>, %arg8: memref<8x128xbf16, #tpu.memory_space<vmem>>) attributes {dimension_semantics = [#tpu.dimension_semantics<parallel>], iteration_bounds = array<i64: 1>, scalar_prefetch = 0 : i64, scratch_operands = 0 : i64, tpu.core_type = #tpu.core_type<tc>, window_params = [{transform_indices = @transform_0, window_bounds = array<i64: 8, 32>}, {pipeline_mode = #tpu.pipeline_mode<synchronous>, transform_indices = @transform_1, window_bounds = array<i64: 32, 256>}, {pipeline_mode = #tpu.pipeline_mode<synchronous>, transform_indices = @transform_2, window_bounds = array<i64: 3, 256>}, {pipeline_mode = #tpu.pipeline_mode<synchronous>, transform_indices = @transform_3, window_bounds = array<i64: 256, 256>}, {pipeline_mode = #tpu.pipeline_mode<synchronous>, transform_indices = @transform_4, window_bounds = array<i64: 256, 256>}, {pipeline_mode = #tpu.pipeline_mode<synchronous>, transform_indices = @transform_5, window_bounds = array<i64: 256, 128>}, {pipeline_mode = #tpu.pipeline_mode<synchronous>, transform_indices = @transform_6, window_bounds = array<i64: 3, 256>}, {transform_indices = @transform_7, window_bounds = array<i64: 8, 128>}]} {
    %c0 = arith.constant 0 : index
    %c0_0 = arith.constant 0 : index
    %0 = vector.load %arg1[%c0, %c0_0] : memref<8x32xf32, #tpu.memory_space<vmem>>, vector<8x32xf32>
    %1 = arith.truncf %0 : vector<8x32xf32> to vector<8x32xbf16>
    %c0_1 = arith.constant 0 : index
    %c0_2 = arith.constant 0 : index
    %2 = vector.load %arg2[%c0_1, %c0_2] : memref<32x256xbf16, #tpu.memory_space<vmem>>, vector<32x256xbf16>
    %cst = arith.constant dense<0.000000e+00> : vector<8x256xf32>
    %3 = tpu.matmul %1, %2, %cst {dimension_numbers = #tpu.dot_dimension_numbers<[1], [0], [0], [1], [0, 0, 1, 1], [], []>} : vector<8x32xbf16>, vector<32x256xbf16>, vector<8x256xf32> -> vector<8x256xf32>
    %c0_3 = arith.constant 0 : index
    %c0_4 = arith.constant 0 : index
    %4 = vector.load %arg3[%c0_3, %c0_4] : memref<3x256xf32, #tpu.memory_space<vmem>>, vector<1x256xf32>
    %5 = vector.broadcast %4 : vector<1x256xf32> to vector<8x256xf32>
    %6 = arith.addf %3, %5 : vector<8x256xf32>
    %7 = tpu.iota {dimensions = array<i32: 1>} : vector<8x256xi32>
    %c32_i32 = arith.constant 32 : i32
    %8 = vector.broadcast %c32_i32 : i32 to vector<8x256xi32>
    %9 = arith.cmpi slt, %7, %8 : vector<8x256xi32>
    %cst_5 = arith.constant dense<0.000000e+00> : vector<8xf32>
    %10 = vector.multi_reduction <add>, %6, %cst_5 [1] : vector<8x256xf32> to vector<8xf32>
    %11 = vector.shape_cast %10 : vector<8xf32> to vector<8x1xf32>
    %cst_6 = arith.constant 3.125000e-02 : f32
    %12 = vector.broadcast %cst_6 : f32 to vector<8x1xf32>
    %13 = arith.mulf %11, %12 : vector<8x1xf32>
    %14 = vector.broadcast %13 : vector<8x1xf32> to vector<8x256xf32>
    %15 = arith.subf %6, %14 : vector<8x256xf32>
    %cst_7 = arith.constant 0.000000e+00 : f32
    %16 = vector.broadcast %cst_7 : f32 to vector<8x256xf32>
    %17 = arith.select %9, %15, %16 : vector<8x256xi1>, vector<8x256xf32>
    %18 = arith.mulf %17, %17 : vector<8x256xf32>
    %cst_8 = arith.constant dense<0.000000e+00> : vector<8xf32>
    %19 = vector.multi_reduction <add>, %18, %cst_8 [1] : vector<8x256xf32> to vector<8xf32>
    %20 = vector.shape_cast %19 : vector<8xf32> to vector<8x1xf32>
    %cst_9 = arith.constant 3.125000e-02 : f32
    %21 = vector.broadcast %cst_9 : f32 to vector<8x1xf32>
    %22 = arith.mulf %20, %21 : vector<8x1xf32>
    %cst_10 = arith.constant 9.99999974E-6 : f32
    %23 = vector.broadcast %cst_10 : f32 to vector<8x1xf32>
    %24 = arith.addf %22, %23 : vector<8x1xf32>
    %25 = math.rsqrt %24 : vector<8x1xf32>
    %26 = vector.broadcast %25 : vector<8x1xf32> to vector<8x256xf32>
    %27 = arith.mulf %17, %26 : vector<8x256xf32>
    %c1 = arith.constant 1 : index
    %c0_11 = arith.constant 0 : index
    %28 = vector.load %arg3[%c1, %c0_11] : memref<3x256xf32, #tpu.memory_space<vmem>>, vector<1x256xf32>
    %29 = vector.broadcast %28 : vector<1x256xf32> to vector<8x256xf32>
    %30 = arith.mulf %27, %29 : vector<8x256xf32>
    %c2 = arith.constant 2 : index
    %c0_12 = arith.constant 0 : index
    %31 = vector.load %arg3[%c2, %c0_12] : memref<3x256xf32, #tpu.memory_space<vmem>>, vector<1x256xf32>
    %32 = vector.broadcast %31 : vector<1x256xf32> to vector<8x256xf32>
    %33 = arith.addf %30, %32 : vector<8x256xf32>
    %34 = math.tanh %33 : vector<8x256xf32>
    %c0_13 = arith.constant 0 : index
    %c0_14 = arith.constant 0 : index
    %35 = vector.load %arg7[%c0_13, %c0_14] : memref<3x256xf32, #tpu.memory_space<vmem>>, vector<1x256xf32>
    %36 = arith.truncf %35 : vector<1x256xf32> to vector<1x256xbf16>
    %c1_15 = arith.constant 1 : index
    %c0_16 = arith.constant 0 : index
    %37 = vector.load %arg7[%c1_15, %c0_16] : memref<3x256xf32, #tpu.memory_space<vmem>>, vector<1x256xf32>
    %38 = arith.truncf %37 : vector<1x256xf32> to vector<1x256xbf16>
    %c2_17 = arith.constant 2 : index
    %c0_18 = arith.constant 0 : index
    %39 = vector.load %arg7[%c2_17, %c0_18] : memref<3x256xf32, #tpu.memory_space<vmem>>, vector<1x128xf32>
    %40 = arith.truncf %34 : vector<8x256xf32> to vector<8x256xbf16>
    %c0_19 = arith.constant 0 : index
    %c0_20 = arith.constant 0 : index
    %41 = vector.load %arg4[%c0_19, %c0_20] : memref<256x256xbf16, #tpu.memory_space<vmem>>, vector<256x256xbf16>
    %cst_21 = arith.constant dense<0.000000e+00> : vector<8x256xf32>
    %42 = tpu.matmul %40, %41, %cst_21 {dimension_numbers = #tpu.dot_dimension_numbers<[1], [0], [0], [1], [0, 0, 1, 1], [], []>} : vector<8x256xbf16>, vector<256x256xbf16>, vector<8x256xf32> -> vector<8x256xf32>
    %43 = arith.truncf %42 : vector<8x256xf32> to vector<8x256xbf16>
    %44 = vector.broadcast %36 : vector<1x256xbf16> to vector<8x256xbf16>
    %45 = arith.addf %43, %44 : vector<8x256xbf16>
    %cst_22 = arith.constant 0.000000e+00 : bf16
    %46 = vector.broadcast %cst_22 : bf16 to vector<8x256xbf16>
    %47 = arith.maximumf %45, %46 : vector<8x256xbf16>
    %c0_23 = arith.constant 0 : index
    %c0_24 = arith.constant 0 : index
    %48 = vector.load %arg5[%c0_23, %c0_24] : memref<256x256xbf16, #tpu.memory_space<vmem>>, vector<256x256xbf16>
    %cst_25 = arith.constant dense<0.000000e+00> : vector<8x256xf32>
    %49 = tpu.matmul %47, %48, %cst_25 {dimension_numbers = #tpu.dot_dimension_numbers<[1], [0], [0], [1], [0, 0, 1, 1], [], []>} : vector<8x256xbf16>, vector<256x256xbf16>, vector<8x256xf32> -> vector<8x256xf32>
    %50 = arith.truncf %49 : vector<8x256xf32> to vector<8x256xbf16>
    %51 = vector.broadcast %38 : vector<1x256xbf16> to vector<8x256xbf16>
    %52 = arith.addf %50, %51 : vector<8x256xbf16>
    %cst_26 = arith.constant 0.000000e+00 : bf16
    %53 = vector.broadcast %cst_26 : bf16 to vector<8x256xbf16>
    %54 = arith.maximumf %52, %53 : vector<8x256xbf16>
    %c0_27 = arith.constant 0 : index
    %c0_28 = arith.constant 0 : index
    %55 = vector.load %arg6[%c0_27, %c0_28] : memref<256x128xbf16, #tpu.memory_space<vmem>>, vector<256x128xbf16>
    %cst_29 = arith.constant dense<0.000000e+00> : vector<8x128xf32>
    %56 = tpu.matmul %54, %55, %cst_29 {dimension_numbers = #tpu.dot_dimension_numbers<[1], [0], [0], [1], [0, 0, 1, 1], [], []>} : vector<8x256xbf16>, vector<256x128xbf16>, vector<8x128xf32> -> vector<8x128xf32>
    %57 = vector.broadcast %39 : vector<1x128xf32> to vector<8x128xf32>
    %58 = arith.addf %56, %57 : vector<8x128xf32>
    %59 = arith.truncf %58 : vector<8x128xf32> to vector<8x128xbf16>
    %c0_30 = arith.constant 0 : index
    %c0_31 = arith.constant 0 : index
    %60 = vector.load %arg8[%c0_30, %c0_31] : memref<8x128xbf16, #tpu.memory_space<vmem>>, vector<8x128xbf16>
    tpu.vector_store %arg8[%c0_30, %c0_31], %59 {strides = array<i32>} : memref<8x128xbf16, #tpu.memory_space<vmem>>, vector<8x128xbf16>,
    return
  }
  func.func @transform_0(%arg0: i32) -> (i32, i32) {
    %c0_i32 = arith.constant 0 : i32
    %c0_i32_0 = arith.constant 0 : i32
    return %arg0, %c0_i32 : i32, i32
  }
  func.func @transform_1(%arg0: i32) -> (i32, i32) {
    %c0_i32 = arith.constant 0 : i32
    %c0_i32_0 = arith.constant 0 : i32
    %c0_i32_1 = arith.constant 0 : i32
    return %c0_i32, %c0_i32_0 : i32, i32
  }
  func.func @transform_2(%arg0: i32) -> (i32, i32) {
    %c0_i32 = arith.constant 0 : i32
    %c0_i32_0 = arith.constant 0 : i32
    %c0_i32_1 = arith.constant 0 : i32
    return %c0_i32, %c0_i32_0 : i32, i32
  }
  func.func @transform_3(%arg0: i32) -> (i32, i32) {
    %c0_i32 = arith.constant 0 : i32
    %c0_i32_0 = arith.constant 0 : i32
    %c0_i32_1 = arith.constant 0 : i32
    return %c0_i32, %c0_i32_0 : i32, i32
  }
  func.func @transform_4(%arg0: i32) -> (i32, i32) {
    %c0_i32 = arith.constant 0 : i32
    %c0_i32_0 = arith.constant 0 : i32
    %c0_i32_1 = arith.constant 0 : i32
    return %c0_i32, %c0_i32_0 : i32, i32
  }
  func.func @transform_5(%arg0: i32) -> (i32, i32) {
    %c0_i32 = arith.constant 0 : i32
    %c0_i32_0 = arith.constant 0 : i32
    %c0_i32_1 = arith.constant 0 : i32
    return %c0_i32, %c0_i32_0 : i32, i32
  }
  func.func @transform_6(%arg0: i32) -> (i32, i32) {
    %c0_i32 = arith.constant 0 : i32
    %c0_i32_0 = arith.constant 0 : i32
    %c0_i32_1 = arith.constant 0 : i32
    return %c0_i32, %c0_i32_0 : i32, i32
  }
  func.func @transform_7(%arg0: i32) -> (i32, i32) {
    %c0_i32 = arith.constant 0 : i32
    %c0_i32_0 = arith.constant 0 : i32
    return %arg0, %c0_i32 : i32, i32
  }
}

</mosaic_0001>

<llo_original>
// kernel: _forward_impl.1
$region0: #{_forward_impl.1}
  #allocation0 [shape = 'u32[]', space=smem, size = 0x4, offset = 0x4, fixed_abs, tag = 'smem constant byte address 0x4 - core index']
  #allocation1 [shape = 'u32[144,128]{1,0:T(1,128)}', space=vmem, size = 0x12000, scoped, tag = 'internal scratch']
  %s0 = inlined_call_operand.hbm [shape: f32[8,32], index: 0, kind: input, shape index: {}]
  %s1 = inlined_call_operand.hbm [shape: bf16[32,256], index: 1, kind: input, shape index: {}]
  %s2 = inlined_call_operand.hbm [shape: f32[3,256], index: 2, kind: input, shape index: {}]
  %s3 = inlined_call_operand.hbm [shape: bf16[256,256], index: 3, kind: input, shape index: {}]
  %s4 = inlined_call_operand.hbm [shape: bf16[256,256], index: 4, kind: input, shape index: {}]
  %s5 = inlined_call_operand.hbm [shape: bf16[256,128], index: 5, kind: input, shape index: {}]
  %s6 = inlined_call_operand.hbm [shape: f32[3,256], index: 6, kind: input, shape index: {}]
  %s7 = inlined_call_operand.hbm [shape: bf16[8,128], index: 7, kind: output, shape index: {}]
  %s8 = sld [smem:[#allocation0]]
  $region66: #{_forward_impl.1} parent=0
    _
  %s10 = ssub.s32 1, %s8
  %s11 = scalar_select 0, %s10, %s8
  $region1: #{_forward_impl.1} parent=0
    #allocation2 [shape = 'u8[4096]{0}', space=vmem, size = 0x1000, scoped, tag = 'input window, operand 0, single buffered']
    #allocation3 [shape = 's32[1]{0}', space=sflag, size = 0x4, scoped, tag = 'scoped memory for _forward_impl.1']
    #allocation4 [shape = 's32[1]{0}', space=sflag, size = 0x4, scoped, tag = 'scoped memory for _forward_impl.1']
    #allocation5 [shape = 'u8[16384]{0}', space=vmem, size = 0x4000, scoped, tag = 'input window, operand 1, single buffered']
    #allocation6 [shape = 's32[1]{0}', space=sflag, size = 0x4, scoped, tag = 'scoped memory for _forward_impl.1']
    #allocation7 [shape = 'u8[4096]{0}', space=vmem, size = 0x1000, scoped, tag = 'input window, operand 2, single buffered']
    #allocation8 [shape = 'u8[131072]{0}', space=vmem, size = 0x20000, scoped, tag = 'input window, operand 3, single buffered']
    #allocation9 [shape = 's32[1]{0}', space=sflag, size = 0x4, scoped, tag = 'scoped memory for _forward_impl.1']
    #allocation10 [shape = 'u8[131072]{0}', space=vmem, size = 0x20000, scoped, tag = 'input window, operand 4, single buffered']
    #allocation11 [shape = 'u8[65536]{0}', space=vmem, size = 0x10000, scoped, tag = 'input window, operand 5, single buffered']
    #allocation12 [shape = 's32[1]{0}', space=sflag, size = 0x4, scoped, tag = 'scoped memory for _forward_impl.1']
    #allocation13 [shape = 'u8[4096]{0}', space=vmem, size = 0x1000, scoped, tag = 'input window, operand 6, single buffered']
    #allocation14 [shape = 'u8[2048]{0}', space=vmem, size = 0x800, scoped, tag = 'output window, operand 0, single buffered']
    %12 = vsyncpa [#allocation3], 0
    %13 = vsyncpa [#allocation6], 0
    %14 = vsyncpa [#allocation9], 0
    %15 = vsyncpa [#allocation12], 0
    %16 = vsyncpa [#allocation4], 0
    // Predicated region
    $region2: #{_forward_impl.1} parent=1 // pred_check
      _
    $region3: #{_forward_impl.1} parent=1 // pred_check_branch
      %18 = sbr.rel (0) target = $region5
    $region4: #{_forward_impl.1} parent=1 // pred_region
      %s20 = ssub.s32 128, 128
      %21 = vsyncadd [#allocation3], %s20
      %s23 = sshll.u32 [#allocation2], 4
      %s24 = int_to_ptr.vmem [resolvable:$true] %s23
      %26 = dma.hbm_to_vmem [thread:$0]  %s0, 128, %s24, [#allocation3]
    $region5: #{_forward_impl.1} parent=1 // pred_fallthru
      _
    // Predicated region
    $region6: #{_forward_impl.1} parent=1 // pred_check
      _
    $region7: #{_forward_impl.1} parent=1 // pred_check_branch
      %28 = sbr.rel (0) target = $region9
    $region8: #{_forward_impl.1} parent=1 // pred_region
      %s30 = ssub.s32 512, 512
      %31 = vsyncadd [#allocation6], %s30
      %s32 = sshll.u32 [#allocation5], 4
      %s33 = int_to_ptr.vmem [resolvable:$true] %s32
      %38 = dma.hbm_to_vmem [thread:$0]  %s1, 512, %s33, [#allocation6], 128, 128, 8
    $region9: #{_forward_impl.1} parent=1 // pred_fallthru
      _
    // Predicated region
    $region10: #{_forward_impl.1} parent=1 // pred_check
      _
    $region11: #{_forward_impl.1} parent=1 // pred_check_branch
      %40 = sbr.rel (0) target = $region13
    $region12: #{_forward_impl.1} parent=1 // pred_region
      %s42 = ssub.s32 128, 128
      %43 = vsyncadd [#allocation6], %s42
      %s45 = sshll.u32 [#allocation7], 4
      %s46 = int_to_ptr.vmem [resolvable:$true] %s45
      %48 = dma.hbm_to_vmem [thread:$0]  %s2, 128, %s46, [#allocation6]
    $region13: #{_forward_impl.1} parent=1 // pred_fallthru
      _
    // Predicated region
    $region14: #{_forward_impl.1} parent=1 // pred_check
      _
    $region15: #{_forward_impl.1} parent=1 // pred_check_branch
      %50 = sbr.rel (0) target = $region17
    $region16: #{_forward_impl.1} parent=1 // pred_region
      %s52 = ssub.s32 4096, 4096
      %53 = vsyncadd [#allocation9], %s52
      %s54 = sshll.u32 [#allocation8], 4
      %s55 = int_to_ptr.vmem [resolvable:$true] %s54
      %60 = dma.hbm_to_vmem [thread:$0]  %s3, 4096, %s55, [#allocation9], 128, 128, 8
    $region17: #{_forward_impl.1} parent=1 // pred_fallthru
      _
    // Predicated region
    $region18: #{_forward_impl.1} parent=1 // pred_check
      _
    $region19: #{_forward_impl.1} parent=1 // pred_check_branch
      %62 = sbr.rel (0) target = $region21
    $region20: #{_forward_impl.1} parent=1 // pred_region
      %s64 = ssub.s32 4096, 4096
      %65 = vsyncadd [#allocation9], %s64
      %s66 = sshll.u32 [#allocation10], 4
      %s67 = int_to_ptr.vmem [resolvable:$true] %s66
      %72 = dma.hbm_to_vmem [thread:$0]  %s4, 4096, %s67, [#allocation9], 128, 128, 8
    $region21: #{_forward_impl.1} parent=1 // pred_fallthru
      _
    // Predicated region
    $region22: #{_forward_impl.1} parent=1 // pred_check
      _
    $region23: #{_forward_impl.1} parent=1 // pred_check_branch
      %74 = sbr.rel (0) target = $region25
    $region24: #{_forward_impl.1} parent=1 // pred_region
      %s76 = ssub.s32 2048, 2048
      %77 = vsyncadd [#allocation12], %s76
      %s78 = sshll.u32 [#allocation11], 4
      %s79 = int_to_ptr.vmem [resolvable:$true] %s78
      %84 = dma.hbm_to_vmem [thread:$0]  %s5, 2048, %s79, [#allocation12], 64, 64, 4
    $region25: #{_forward_impl.1} parent=1 // pred_fallthru
      _
    // Predicated region
    $region26: #{_forward_impl.1} parent=1 // pred_check
      _
    $region27: #{_forward_impl.1} parent=1 // pred_check_branch
      %86 = sbr.rel (0) target = $region29
    $region28: #{_forward_impl.1} parent=1 // pred_region
      %s88 = ssub.s32 128, 128
      %89 = vsyncadd [#allocation12], %s88
      %s91 = sshll.u32 [#allocation13], 4
      %s92 = int_to_ptr.vmem [resolvable:$true] %s91
      %94 = dma.hbm_to_vmem [thread:$0]  %s6, 128, %s92, [#allocation12]
    $region29: #{_forward_impl.1} parent=1 // pred_fallthru
      _
    // Predicated region
    $region30: #{_forward_impl.1} parent=1 // pred_check
      _
    $region31: #{_forward_impl.1} parent=1 // pred_check_branch
      %96 = sbr.rel (0) target = $region33
    $region32: #{_forward_impl.1} parent=1 // pred_region
      %97 = dma.done [#allocation3], 128
    $region33: #{_forward_impl.1} parent=1 // pred_fallthru
      _
    // Predicated region
    $region34: #{_forward_impl.1} parent=1 // pred_check
      _
    $region35: #{_forward_impl.1} parent=1 // pred_check_branch
      %99 = sbr.rel (0) target = $region37
    $region36: #{_forward_impl.1} parent=1 // pred_region
      %100 = dma.done [#allocation6], 512
    $region37: #{_forward_impl.1} parent=1 // pred_fallthru
      _
    // Predicated region
    $region38: #{_forward_impl.1} parent=1 // pred_check
      _
    $region39: #{_forward_impl.1} parent=1 // pred_check_branch
      %102 = sbr.rel (0) target = $region41
    $region40: #{_forward_impl.1} parent=1 // pred_region
      %103 = dma.done [#allocation6], 128
    $region41: #{_forward_impl.1} parent=1 // pred_fallthru
      _
    // Predicated region
    $region42: #{_forward_impl.1} parent=1 // pred_check
      _
    $region43: #{_forward_impl.1} parent=1 // pred_check_branch
      %105 = sbr.rel (0) target = $region45
    $region44: #{_forward_impl.1} parent=1 // pred_region
      %106 = dma.done [#allocation9], 4096
    $region45: #{_forward_impl.1} parent=1 // pred_fallthru
      _
    // Predicated region
    $region46: #{_forward_impl.1} parent=1 // pred_check
      _
    $region47: #{_forward_impl.1} parent=1 // pred_check_branch
      %108 = sbr.rel (0) target = $region49
    $region48: #{_forward_impl.1} parent=1 // pred_region
      %109 = dma.done [#allocation9], 4096
    $region49: #{_forward_impl.1} parent=1 // pred_fallthru
      _
    // Predicated region
    $region50: #{_forward_impl.1} parent=1 // pred_check
      _
    $region51: #{_forward_impl.1} parent=1 // pred_check_branch
      %111 = sbr.rel (0) target = $region53
    $region52: #{_forward_impl.1} parent=1 // pred_region
      %112 = dma.done [#allocation12], 2048
    $region53: #{_forward_impl.1} parent=1 // pred_fallthru
      _
    // Predicated region
    $region54: #{_forward_impl.1} parent=1 // pred_check
      _
    $region55: #{_forward_impl.1} parent=1 // pred_check_branch
      %114 = sbr.rel (0) target = $region57
    $region56: #{_forward_impl.1} parent=1 // pred_region
      %115 = dma.done [#allocation12], 128
    $region57: #{_forward_impl.1} parent=1 // pred_fallthru
      _
    %v117 = vld [vmem:[#allocation2] sm:$0xff]
    %v118 = vpack.c.bf16 %v117, %v117
    %v119 = vld [vmem:[#allocation5] sm:$0xff]
    %v120 = vld [vmem:[#allocation5 + $0x8] sm:$0xff]
    %v121 = vld [vmem:[#allocation5 + $0x10] sm:$0xff]
    %v122 = vld [vmem:[#allocation5 + $0x18] sm:$0xff]
    %v123 = vld [vmem:[#allocation7] ss:$4 sm:$0x3]
    %v125 = vlaneseq
    %v126 = vshrl.u32 %v125, 7
    %v127 = vsub.s32 0, %v126
    %v128 = vrot.slane %v123, %v127
    %v129 = vlaneseq
    %v130 = vshrl.u32 %v129, 7
    %v131 = vsub.s32 1, %v130
    %v132 = vrot.slane %v123, %v131
    %v139 = vunpack.c.l.b16 %v119
    %v140 = vunpack.c.h.b16 %v119
    %v141 = vunpack.c.l.b16 %v120
    %v142 = vunpack.c.h.b16 %v120
    %v143 = vunpack.c.l.b16 %v121
    %v144 = vunpack.c.h.b16 %v121
    %v145 = vunpack.c.l.b16 %v122
    %v146 = vunpack.c.h.b16 %v122
    %v147 = vpack.c.b16 %v141, %v139
    %v148 = vpack.c.b16 %v142, %v140
    %v149 = vpack.c.b16 %v145, %v143
    %v150 = vpack.c.b16 %v146, %v144
    %vm155 = vcmask 261120
    %v157 = vsel %vm155, %v118, 0
    %159 = vmatprep.subr.bf16.mxu0 %v148
    %160 = vmatpush1.bf16.msra.mxu0 %v147
    %161 = vmatprep.subr.bf16.mxu0 %v150
    %162 = vmatpush1.bf16.msra.mxu0 %v149
    %163 = vmatprep.subr.bf16.mxu0 0
    %164 = vmatpush1.bf16.msra.mxu0 0
    %165 = vmatprep.subr.bf16.mxu0 0
    %166 = vmatpush1.bf16.msra.mxu0 0
    %167 = vmatprep.subr.bf16.mxu0 0
    %168 = vmatpush1.bf16.msra.mxu0 0
    %169 = vmatprep.subr.bf16.mxu0 0
    %170 = vmatpush1.bf16.msra.mxu0 0
    %171 = vmatprep.subr.bf16.mxu0 0
    %172 = vmatpush1.bf16.msra.mxu0 0
    %173 = vmatprep.subr.bf16.mxu0 0
    %174 = vmatpush1.bf16.msra.mxu0 0
    %175 = vmatprep.subr.bf16.mxu0 0
    %176 = vmatpush1.bf16.msra.mxu0 0
    %177 = vmatprep.subr.bf16.mxu0 0
    %178 = vmatpush1.bf16.msra.mxu0 0
    %179 = vmatprep.subr.bf16.mxu0 0
    %180 = vmatpush1.bf16.msra.mxu0 0
    %181 = vmatprep.subr.bf16.mxu0 0
    %182 = vmatpush1.bf16.msra.mxu0 0
    %183 = vmatprep.subr.bf16.mxu0 0
    %184 = vmatpush1.bf16.msra.mxu0 0
    %185 = vmatprep.subr.bf16.mxu0 0
    %186 = vmatpush1.bf16.msra.mxu0 0
    %187 = vmatprep.subr.bf16.mxu0 0
    %188 = vmatpush1.bf16.msra.mxu0 0
    %189 = vmatprep.subr.bf16.mxu0 0
    %190 = vmatpush1.bf16.msra.mxu0 0
    %191 = vmatprep.mubr.bf16.mxu0 0
    %192 = vmatmul.mubr.bf16.gmra.mrb[0].mxu0 %v157
    %v193 = vpop.f32.mrb[0].mxu0
    %v194 = vadd.f32 %v128, %v193
    %v195 = vpop.f32.mrb[0].mxu0
    %v196 = vadd.f32 %v132, %v195
    %v197 = vpop.f32.mrb[0].mxu0
    %v198 = vpop.f32.mrb[0].mxu0
    %199 = vdwg.mxu0
    %v200 = vlaneseq
    %v201 = vand.u32 %v200, 127
    %v202 = vadd.s32 %v201, 128
    %vm203 = vcmp.lt.s32.totalorder %v201, 32
    %vm204 = vcmp.lt.s32.totalorder %v202, 32
    %v205 = vadd.f32 %v194, %v196
    %206 = vadd.xlane.f32.xlu0 %v205
    %v207 = vpop.xlane.xlu0 %206
    %v208 = vmul.f32 %v207, 0.03125
    %v209 = vsub.f32 %v194, %v208
    %v210 = vsub.f32 %v196, %v208
    %v211 = vsel %vm203, %v209, 0.0
    %v212 = vsel %vm204, %v210, 0.0
    %v213 = vmul.f32 %v211, %v211
    %v214 = vmul.f32 %v212, %v212
    %v215 = vadd.f32 %v213, %v214
    %216 = vadd.xlane.f32.xlu0 %v215
    %v217 = vpop.xlane.xlu0 %216
    %v218 = vmul.f32 %v217, 0.03125
    %v219 = vadd.f32 %v218, 1e-05
    %v220 = vrsqrt.pop %v219
    %v221 = vmul.f32 %v211, %v220
    %v222 = vmul.f32 %v212, %v220
    %s223 = scalar_lea.vmem [#allocation7], 1
    %v224 = vld [vmem:[%s223] ss:$4 sm:$0x3]
    %v226 = vlaneseq
    %v227 = vshrl.u32 %v226, 7
    %v228 = vsub.s32 0, %v227
    %v229 = vrot.slane %v224, %v228
    %v230 = vlaneseq
    %v231 = vshrl.u32 %v230, 7
    %v232 = vsub.s32 1, %v231
    %v233 = vrot.slane %v224, %v232
    %v236 = vmul.f32 %v221, %v229
    %v237 = vmul.f32 %v222, %v233
    %s238 = scalar_lea.vmem [#allocation7], 2
    %v239 = vld [vmem:[%s238] ss:$4 sm:$0x3]
    %v241 = vlaneseq
    %v242 = vshrl.u32 %v241, 7
    %v243 = vsub.s32 0, %v242
    %v244 = vrot.slane %v239, %v243
    %v245 = vlaneseq
    %v246 = vshrl.u32 %v245, 7
    %v247 = vsub.s32 1, %v246
    %v248 = vrot.slane %v239, %v247
    %v251 = vadd.f32 %v236, %v244
    %v252 = vadd.f32 %v237, %v248
    %v253 = vtanh.pop %v251
    %v254 = vtanh.pop %v252
    %v255 = vld [vmem:[#allocation13] ss:$4 sm:$0x3]
    %v257 = vlaneseq
    %v258 = vshrl.u32 %v257, 7
    %v259 = vsub.s32 0, %v258
    %v260 = vrot.slane %v255, %v259
    %v261 = vlaneseq
    %v262 = vshrl.u32 %v261, 7
    %v263 = vsub.s32 1, %v262
    %v264 = vrot.slane %v255, %v263
    %v267 = vpack.c.bf16 %v260, %v260
    %v268 = vpack.c.bf16 %v264, %v264
    %s269 = scalar_lea.vmem [#allocation13], 1
    %v270 = vld [vmem:[%s269] ss:$4 sm:$0x3]
    %v272 = vlaneseq
    %v273 = vshrl.u32 %v272, 7
    %v274 = vsub.s32 0, %v273
    %v275 = vrot.slane %v270, %v274
    %v276 = vlaneseq
    %v277 = vshrl.u32 %v276, 7
    %v278 = vsub.s32 1, %v277
    %v279 = vrot.slane %v270, %v278
    %v282 = vpack.c.bf16 %v275, %v275
    %v283 = vpack.c.bf16 %v279, %v279
    %v284 = vld [vmem:[#allocation13 + $0x2] sm:$0x1]
    %v285 = vpack.c.bf16 %v253, %v253
    %v286 = vpack.c.bf16 %v254, %v254
    %v287 = vld [vmem:[#allocation8] sm:$0xff]
    %v288 = vld [vmem:[#allocation8 + $0x8] sm:$0xff]
    %v289 = vld [vmem:[#allocation8 + $0x10] sm:$0xff]
    %v290 = vld [vmem:[#allocation8 + $0x18] sm:$0xff]
    %v291 = vld [vmem:[#allocation8 + $0x20] sm:$0xff]
    %v292 = vld [vmem:[#allocation8 + $0x28] sm:$0xff]
    %v293 = vld [vmem:[#allocation8 + $0x30] sm:$0xff]
    %v294 = vld [vmem:[#allocation8 + $0x38] sm:$0xff]
    %v295 = vld [vmem:[#allocation8 + $0x40] sm:$0xff]
    %v296 = vld [vmem:[#allocation8 + $0x48] sm:$0xff]
    %v297 = vld [vmem:[#allocation8 + $0x50] sm:$0xff]
    %v298 = vld [vmem:[#allocation8 + $0x58] sm:$0xff]
    %v299 = vld [vmem:[#allocation8 + $0x60] sm:$0xff]
    %v300 = vld [vmem:[#allocation8 + $0x68] sm:$0xff]
    %v301 = vld [vmem:[#allocation8 + $0x70] sm:$0xff]
    %v302 = vld [vmem:[#allocation8 + $0x78] sm:$0xff]
    %v303 = vld [vmem:[#allocation8 + $0x80] sm:$0xff]
    %v304 = vld [vmem:[#allocation8 + $0x88] sm:$0xff]
    %v305 = vld [vmem:[#allocation8 + $0x90] sm:$0xff]
    %v306 = vld [vmem:[#allocation8 + $0x98] sm:$0xff]
    %v307 = vld [vmem:[#allocation8 + $0xa0] sm:$0xff]
    %v308 = vld [vmem:[#allocation8 + $0xa8] sm:$0xff]
    %v309 = vld [vmem:[#allocation8 + $0xb0] sm:$0xff]
    %v310 = vld [vmem:[#allocation8 + $0xb8] sm:$0xff]
    %v311 = vld [vmem:[#allocation8 + $0xc0] sm:$0xff]
    %v312 = vld [vmem:[#allocation8 + $0xc8] sm:$0xff]
    %v313 = vld [vmem:[#allocation8 + $0xd0] sm:$0xff]
    %v314 = vld [vmem:[#allocation8 + $0xd8] sm:$0xff]
    %v315 = vld [vmem:[#allocation8 + $0xe0] sm:$0xff]
    %v316 = vld [vmem:[#allocation8 + $0xe8] sm:$0xff]
    %v317 = vld [vmem:[#allocation8 + $0xf0] sm:$0xff]
    %v318 = vld [vmem:[#allocation8 + $0xf8] sm:$0xff]
    %v351 = vunpack.c.l.b16 %v287
    %v352 = vunpack.c.h.b16 %v287
    %v353 = vunpack.c.l.b16 %v288
    %v354 = vunpack.c.h.b16 %v288
    %v355 = vunpack.c.l.b16 %v289
    %v356 = vunpack.c.h.b16 %v289
    %v357 = vunpack.c.l.b16 %v290
    %v358 = vunpack.c.h.b16 %v290
    %v359 = vunpack.c.l.b16 %v291
    %v360 = vunpack.c.h.b16 %v291
    %v361 = vunpack.c.l.b16 %v292
    %v362 = vunpack.c.h.b16 %v292
    %v363 = vunpack.c.l.b16 %v293
    %v364 = vunpack.c.h.b16 %v293
    %v365 = vunpack.c.l.b16 %v294
    %v366 = vunpack.c.h.b16 %v294
    %v367 = vunpack.c.l.b16 %v295
    %v368 = vunpack.c.h.b16 %v295
    %v369 = vunpack.c.l.b16 %v296
    %v370 = vunpack.c.h.b16 %v296
    %v371 = vunpack.c.l.b16 %v297
    %v372 = vunpack.c.h.b16 %v297
    %v373 = vunpack.c.l.b16 %v298
    %v374 = vunpack.c.h.b16 %v298
    %v375 = vunpack.c.l.b16 %v299
    %v376 = vunpack.c.h.b16 %v299
    %v377 = vunpack.c.l.b16 %v300
    %v378 = vunpack.c.h.b16 %v300
    %v379 = vunpack.c.l.b16 %v301
    %v380 = vunpack.c.h.b16 %v301
    %v381 = vunpack.c.l.b16 %v302
    %v382 = vunpack.c.h.b16 %v302
    %v383 = vunpack.c.l.b16 %v303
    %v384 = vunpack.c.h.b16 %v303
    %v385 = vunpack.c.l.b16 %v304
    %v386 = vunpack.c.h.b16 %v304
    %v387 = vunpack.c.l.b16 %v305
    %v388 = vunpack.c.h.b16 %v305
    %v389 = vunpack.c.l.b16 %v306
    %v390 = vunpack.c.h.b16 %v306
    %v391 = vunpack.c.l.b16 %v307
    %v392 = vunpack.c.h.b16 %v307
    %v393 = vunpack.c.l.b16 %v308
    %v394 = vunpack.c.h.b16 %v308
    %v395 = vunpack.c.l.b16 %v309
    %v396 = vunpack.c.h.b16 %v309
    %v397 = vunpack.c.l.b16 %v310
    %v398 = vunpack.c.h.b16 %v310
    %v399 = vunpack.c.l.b16 %v311
    %v400 = vunpack.c.h.b16 %v311
    %v401 = vunpack.c.l.b16 %v312
    %v402 = vunpack.c.h.b16 %v312
    %v403 = vunpack.c.l.b16 %v313
    %v404 = vunpack.c.h.b16 %v313
    %v405 = vunpack.c.l.b16 %v314
    %v406 = vunpack.c.h.b16 %v314
    %v407 = vunpack.c.l.b16 %v315
    %v408 = vunpack.c.h.b16 %v315
    %v409 = vunpack.c.l.b16 %v316
    %v410 = vunpack.c.h.b16 %v316
    %v411 = vunpack.c.l.b16 %v317
    %v412 = vunpack.c.h.b16 %v317
    %v413 = vunpack.c.l.b16 %v318
    %v414 = vunpack.c.h.b16 %v318
    %v415 = vpack.c.b16 %v353, %v351
    %v416 = vpack.c.b16 %v354, %v352
    %v417 = vpack.c.b16 %v357, %v355
    %v418 = vpack.c.b16 %v358, %v356
    %v419 = vpack.c.b16 %v361, %v359
    %v420 = vpack.c.b16 %v362, %v360
    %v421 = vpack.c.b16 %v365, %v363
    %v422 = vpack.c.b16 %v366, %v364
    %v423 = vpack.c.b16 %v369, %v367
    %v424 = vpack.c.b16 %v370, %v368
    %v425 = vpack.c.b16 %v373, %v371
    %v426 = vpack.c.b16 %v374, %v372
    %v427 = vpack.c.b16 %v377, %v375
    %v428 = vpack.c.b16 %v378, %v376
    %v429 = vpack.c.b16 %v381, %v379
    %v430 = vpack.c.b16 %v382, %v380
    %v431 = vpack.c.b16 %v385, %v383
    %v432 = vpack.c.b16 %v386, %v384
    %v433 = vpack.c.b16 %v389, %v387
    %v434 = vpack.c.b16 %v390, %v388
    %v435 = vpack.c.b16 %v393, %v391
    %v436 = vpack.c.b16 %v394, %v392
    %v437 = vpack.c.b16 %v397, %v395
    %v438 = vpack.c.b16 %v398, %v396
    %v439 = vpack.c.b16 %v401, %v399
    %v440 = vpack.c.b16 %v402, %v400
    %v441 = vpack.c.b16 %v405, %v403
    %v442 = vpack.c.b16 %v406, %v404
    %v443 = vpack.c.b16 %v409, %v407
    %v444 = vpack.c.b16 %v410, %v408
    %v445 = vpack.c.b16 %v413, %v411
    %v446 = vpack.c.b16 %v414, %v412
    %479 = vmatprep.subr.bf16.mxu0 %v416
    %480 = vmatpush1.bf16.msra.mxu0 %v415
    %481 = vmatprep.subr.bf16.mxu0 %v418
    %482 = vmatpush1.bf16.msra.mxu0 %v417
    %483 = vmatprep.subr.bf16.mxu0 %v420
    %484 = vmatpush1.bf16.msra.mxu0 %v419
    %485 = vmatprep.subr.bf16.mxu0 %v422
    %486 = vmatpush1.bf16.msra.mxu0 %v421
    %487 = vmatprep.subr.bf16.mxu0 %v424
    %488 = vmatpush1.bf16.msra.mxu0 %v423
    %489 = vmatprep.subr.bf16.mxu0 %v426
    %490 = vmatpush1.bf16.msra.mxu0 %v425
    %491 = vmatprep.subr.bf16.mxu0 %v428
    %492 = vmatpush1.bf16.msra.mxu0 %v427
    %493 = vmatprep.subr.bf16.mxu0 %v430
    %494 = vmatpush1.bf16.msra.mxu0 %v429
    %495 = vmatprep.subr.bf16.mxu0 %v432
    %496 = vmatpush1.bf16.msra.mxu0 %v431
    %497 = vmatprep.subr.bf16.mxu0 %v434
    %498 = vmatpush1.bf16.msra.mxu0 %v433
    %499 = vmatprep.subr.bf16.mxu0 %v436
    %500 = vmatpush1.bf16.msra.mxu0 %v435
    %501 = vmatprep.subr.bf16.mxu0 %v438
    %502 = vmatpush1.bf16.msra.mxu0 %v437
    %503 = vmatprep.subr.bf16.mxu0 %v440
    %504 = vmatpush1.bf16.msra.mxu0 %v439
    %505 = vmatprep.subr.bf16.mxu0 %v442
    %506 = vmatpush1.bf16.msra.mxu0 %v441
    %507 = vmatprep.subr.bf16.mxu0 %v444
    %508 = vmatpush1.bf16.msra.mxu0 %v443
    %509 = vmatprep.subr.bf16.mxu0 %v446
    %510 = vmatpush1.bf16.msra.mxu0 %v445
    %511 = vmatprep.mubr.bf16.mxu0 %v286
    %512 = vmatmul.mubr.bf16.gmra.mrb[0].mxu0 %v285
    %v513 = vpop.f32.mrb[0].mxu0
    %v514 = vadd.f32 0.0, %v513
    %v515 = vpop.f32.mrb[0].mxu0
    %v516 = vadd.f32 0.0, %v515
    %v517 = vpop.f32.mrb[0].mxu0
    %v518 = vpop.f32.mrb[0].mxu0
    %519 = vdwg.mxu0
    %v520 = vpack.c.bf16 %v514, %v514
    %v521 = vpack.c.bf16 %v516, %v516
    %v523 = vpack.i.b16 %v267, %v267
    %v525 = vlaneseq
    %v526 = vshrl.u32 %v525, 7
    %v527 = vsub.s32 0, %v526
    %v528 = vrot.slane %v523, %v527
    %v530 = vpack.i.b16 %v268, %v268
    %v532 = vlaneseq
    %v533 = vshrl.u32 %v532, 7
    %v534 = vsub.s32 0, %v533
    %v535 = vrot.slane %v530, %v534
    %v536 = vadd.bf16 %v520, %v528
    %v537 = vadd.bf16 %v521, %v535
    %v538 = vmax.bf16 %v536, 0
    %v539 = vmax.bf16 %v537, 0
    %v540 = vld [vmem:[#allocation10] sm:$0xff]
    %v541 = vld [vmem:[#allocation10 + $0x8] sm:$0xff]
    %v542 = vld [vmem:[#allocation10 + $0x10] sm:$0xff]
    %v543 = vld [vmem:[#allocation10 + $0x18] sm:$0xff]
    %v544 = vld [vmem:[#allocation10 + $0x20] sm:$0xff]
    %v545 = vld [vmem:[#allocation10 + $0x28] sm:$0xff]
    %v546 = vld [vmem:[#allocation10 + $0x30] sm:$0xff]
    %v547 = vld [vmem:[#allocation10 + $0x38] sm:$0xff]
    %v548 = vld [vmem:[#allocation10 + $0x40] sm:$0xff]
    %v549 = vld [vmem:[#allocation10 + $0x48] sm:$0xff]
    %v550 = vld [vmem:[#allocation10 + $0x50] sm:$0xff]
    %v551 = vld [vmem:[#allocation10 + $0x58] sm:$0xff]
    %v552 = vld [vmem:[#allocation10 + $0x60] sm:$0xff]
    %v553 = vld [vmem:[#allocation10 + $0x68] sm:$0xff]
    %v554 = vld [vmem:[#allocation10 + $0x70] sm:$0xff]
    %v555 = vld [vmem:[#allocation10 + $0x78] sm:$0xff]
    %v556 = vld [vmem:[#allocation10 + $0x80] sm:$0xff]
    %v557 = vld [vmem:[#allocation10 + $0x88] sm:$0xff]
    %v558 = vld [vmem:[#allocation10 + $0x90] sm:$0xff]
    %v559 = vld [vmem:[#allocation10 + $0x98] sm:$0xff]
    %v560 = vld [vmem:[#allocation10 + $0xa0] sm:$0xff]
    %v561 = vld [vmem:[#allocation10 + $0xa8] sm:$0xff]
    %v562 = vld [vmem:[#allocation10 + $0xb0] sm:$0xff]
    %v563 = vld [vmem:[#allocation10 + $0xb8] sm:$0xff]
    %v564 = vld [vmem:[#allocation10 + $0xc0] sm:$0xff]
    %v565 = vld [vmem:[#allocation10 + $0xc8] sm:$0xff]
    %v566 = vld [vmem:[#allocation10 + $0xd0] sm:$0xff]
    %v567 = vld [vmem:[#allocation10 + $0xd8] sm:$0xff]
    %v568 = vld [vmem:[#allocation10 + $0xe0] sm:$0xff]
    %v569 = vld [vmem:[#allocation10 + $0xe8] sm:$0xff]
    %v570 = vld [vmem:[#allocation10 + $0xf0] sm:$0xff]
    %v571 = vld [vmem:[#allocation10 + $0xf8] sm:$0xff]
    %v604 = vunpack.c.l.b16 %v540
    %v605 = vunpack.c.h.b16 %v540
    %v606 = vunpack.c.l.b16 %v541
    %v607 = vunpack.c.h.b16 %v541
    %v608 = vunpack.c.l.b16 %v542
    %v609 = vunpack.c.h.b16 %v542
    %v610 = vunpack.c.l.b16 %v543
    %v611 = vunpack.c.h.b16 %v543
    %v612 = vunpack.c.l.b16 %v544
    %v613 = vunpack.c.h.b16 %v544
    %v614 = vunpack.c.l.b16 %v545
    %v615 = vunpack.c.h.b16 %v545
    %v616 = vunpack.c.l.b16 %v546
    %v617 = vunpack.c.h.b16 %v546
    %v618 = vunpack.c.l.b16 %v547
    %v619 = vunpack.c.h.b16 %v547
    %v620 = vunpack.c.l.b16 %v548
    %v621 = vunpack.c.h.b16 %v548
    %v622 = vunpack.c.l.b16 %v549
    %v623 = vunpack.c.h.b16 %v549
    %v624 = vunpack.c.l.b16 %v550
    %v625 = vunpack.c.h.b16 %v550
    %v626 = vunpack.c.l.b16 %v551
    %v627 = vunpack.c.h.b16 %v551
    %v628 = vunpack.c.l.b16 %v552
    %v629 = vunpack.c.h.b16 %v552
    %v630 = vunpack.c.l.b16 %v553
    %v631 = vunpack.c.h.b16 %v553
    %v632 = vunpack.c.l.b16 %v554
    %v633 = vunpack.c.h.b16 %v554
    %v634 = vunpack.c.l.b16 %v555
    %v635 = vunpack.c.h.b16 %v555
    %v636 = vunpack.c.l.b16 %v556
    %v637 = vunpack.c.h.b16 %v556
    %v638 = vunpack.c.l.b16 %v557
    %v639 = vunpack.c.h.b16 %v557
    %v640 = vunpack.c.l.b16 %v558
    %v641 = vunpack.c.h.b16 %v558
    %v642 = vunpack.c.l.b16 %v559
    %v643 = vunpack.c.h.b16 %v559
    %v644 = vunpack.c.l.b16 %v560
    %v645 = vunpack.c.h.b16 %v560
    %v646 = vunpack.c.l.b16 %v561
    %v647 = vunpack.c.h.b16 %v561
    %v648 = vunpack.c.l.b16 %v562
    %v649 = vunpack.c.h.b16 %v562
    %v650 = vunpack.c.l.b16 %v563
    %v651 = vunpack.c.h.b16 %v563
    %v652 = vunpack.c.l.b16 %v564
    %v653 = vunpack.c.h.b16 %v564
    %v654 = vunpack.c.l.b16 %v565
    %v655 = vunpack.c.h.b16 %v565
    %v656 = vunpack.c.l.b16 %v566
    %v657 = vunpack.c.h.b16 %v566
    %v658 = vunpack.c.l.b16 %v567
    %v659 = vunpack.c.h.b16 %v567
    %v660 = vunpack.c.l.b16 %v568
    %v661 = vunpack.c.h.b16 %v568
    %v662 = vunpack.c.l.b16 %v569
    %v663 = vunpack.c.h.b16 %v569
    %v664 = vunpack.c.l.b16 %v570
    %v665 = vunpack.c.h.b16 %v570
    %v666 = vunpack.c.l.b16 %v571
    %v667 = vunpack.c.h.b16 %v571
    %v668 = vpack.c.b16 %v606, %v604
    %v669 = vpack.c.b16 %v607, %v605
    %v670 = vpack.c.b16 %v610, %v608
    %v671 = vpack.c.b16 %v611, %v609
    %v672 = vpack.c.b16 %v614, %v612
    %v673 = vpack.c.b16 %v615, %v613
    %v674 = vpack.c.b16 %v618, %v616
    %v675 = vpack.c.b16 %v619, %v617
    %v676 = vpack.c.b16 %v622, %v620
    %v677 = vpack.c.b16 %v623, %v621
    %v678 = vpack.c.b16 %v626, %v624
    %v679 = vpack.c.b16 %v627, %v625
    %v680 = vpack.c.b16 %v630, %v628
    %v681 = vpack.c.b16 %v631, %v629
    %v682 = vpack.c.b16 %v634, %v632
    %v683 = vpack.c.b16 %v635, %v633
    %v684 = vpack.c.b16 %v638, %v636
    %v685 = vpack.c.b16 %v639, %v637
    %v686 = vpack.c.b16 %v642, %v640
    %v687 = vpack.c.b16 %v643, %v641
    %v688 = vpack.c.b16 %v646, %v644
    %v689 = vpack.c.b16 %v647, %v645
    %v690 = vpack.c.b16 %v650, %v648
    %v691 = vpack.c.b16 %v651, %v649
    %v692 = vpack.c.b16 %v654, %v652
    %v693 = vpack.c.b16 %v655, %v653
    %v694 = vpack.c.b16 %v658, %v656
    %v695 = vpack.c.b16 %v659, %v657
    %v696 = vpack.c.b16 %v662, %v660
    %v697 = vpack.c.b16 %v663, %v661
    %v698 = vpack.c.b16 %v666, %v664
    %v699 = vpack.c.b16 %v667, %v665
    %732 = vmatprep.subr.bf16.mxu0 %v669
    %733 = vmatpush1.bf16.msra.mxu0 %v668
    %734 = vmatprep.subr.bf16.mxu0 %v671
    %735 = vmatpush1.bf16.msra.mxu0 %v670
    %736 = vmatprep.subr.bf16.mxu0 %v673
    %737 = vmatpush1.bf16.msra.mxu0 %v672
    %738 = vmatprep.subr.bf16.mxu0 %v675
    %739 = vmatpush1.bf16.msra.mxu0 %v674
    %740 = vmatprep.subr.bf16.mxu0 %v677
    %741 = vmatpush1.bf16.msra.mxu0 %v676
    %742 = vmatprep.subr.bf16.mxu0 %v679
    %743 = vmatpush1.bf16.msra.mxu0 %v678
    %744 = vmatprep.subr.bf16.mxu0 %v681
    %745 = vmatpush1.bf16.msra.mxu0 %v680
    %746 = vmatprep.subr.bf16.mxu0 %v683
    %747 = vmatpush1.bf16.msra.mxu0 %v682
    %748 = vmatprep.subr.bf16.mxu0 %v685
    %749 = vmatpush1.bf16.msra.mxu0 %v684
    %750 = vmatprep.subr.bf16.mxu0 %v687
    %751 = vmatpush1.bf16.msra.mxu0 %v686
    %752 = vmatprep.subr.bf16.mxu0 %v689
    %753 = vmatpush1.bf16.msra.mxu0 %v688
    %754 = vmatprep.subr.bf16.mxu0 %v691
    %755 = vmatpush1.bf16.msra.mxu0 %v690
    %756 = vmatprep.subr.bf16.mxu0 %v693
    %757 = vmatpush1.bf16.msra.mxu0 %v692
    %758 = vmatprep.subr.bf16.mxu0 %v695
    %759 = vmatpush1.bf16.msra.mxu0 %v694
    %760 = vmatprep.subr.bf16.mxu0 %v697
    %761 = vmatpush1.bf16.msra.mxu0 %v696
    %762 = vmatprep.subr.bf16.mxu0 %v699
    %763 = vmatpush1.bf16.msra.mxu0 %v698
    %764 = vmatprep.mubr.bf16.mxu0 %v539
    %765 = vmatmul.mubr.bf16.gmra.mrb[0].mxu0 %v538
    %v766 = vpop.f32.mrb[0].mxu0
    %v767 = vadd.f32 0.0, %v766
    %v768 = vpop.f32.mrb[0].mxu0
    %v769 = vadd.f32 0.0, %v768
    %v770 = vpop.f32.mrb[0].mxu0
    %v771 = vpop.f32.mrb[0].mxu0
    %772 = vdwg.mxu0
    %v773 = vpack.c.bf16 %v767, %v767
    %v774 = vpack.c.bf16 %v769, %v769
    %v776 = vpack.i.b16 %v282, %v282
    %v778 = vlaneseq
    %v779 = vshrl.u32 %v778, 7
    %v780 = vsub.s32 0, %v779
    %v781 = vrot.slane %v776, %v780
    %v783 = vpack.i.b16 %v283, %v283
    %v785 = vlaneseq
    %v786 = vshrl.u32 %v785, 7
    %v787 = vsub.s32 0, %v786
    %v788 = vrot.slane %v783, %v787
    %v789 = vadd.bf16 %v773, %v781
    %v790 = vadd.bf16 %v774, %v788
    %v791 = vmax.bf16 %v789, 0
    %v792 = vmax.bf16 %v790, 0
    %v793 = vld [vmem:[#allocation11] sm:$0xf]
    %v794 = vld [vmem:[#allocation11 + $0x4] sm:$0xf]
    %v795 = vld [vmem:[#allocation11 + $0x8] sm:$0xf]
    %v796 = vld [vmem:[#allocation11 + $0xc] sm:$0xf]
    %v797 = vld [vmem:[#allocation11 + $0x10] sm:$0xf]
    %v798 = vld [vmem:[#allocation11 + $0x14] sm:$0xf]
    %v799 = vld [vmem:[#allocation11 + $0x18] sm:$0xf]
    %v800 = vld [vmem:[#allocation11 + $0x1c] sm:$0xf]
    %v801 = vld [vmem:[#allocation11 + $0x20] sm:$0xf]
    %v802 = vld [vmem:[#allocation11 + $0x24] sm:$0xf]
    %v803 = vld [vmem:[#allocation11 + $0x28] sm:$0xf]
    %v804 = vld [vmem:[#allocation11 + $0x2c] sm:$0xf]
    %v805 = vld [vmem:[#allocation11 + $0x30] sm:$0xf]
    %v806 = vld [vmem:[#allocation11 + $0x34] sm:$0xf]
    %v807 = vld [vmem:[#allocation11 + $0x38] sm:$0xf]
    %v808 = vld [vmem:[#allocation11 + $0x3c] sm:$0xf]
    %v809 = vld [vmem:[#allocation11 + $0x40] sm:$0xf]
    %v810 = vld [vmem:[#allocation11 + $0x44] sm:$0xf]
    %v811 = vld [vmem:[#allocation11 + $0x48] sm:$0xf]
    %v812 = vld [vmem:[#allocation11 + $0x4c] sm:$0xf]
    %v813 = vld [vmem:[#allocation11 + $0x50] sm:$0xf]
    %v814 = vld [vmem:[#allocation11 + $0x54] sm:$0xf]
    %v815 = vld [vmem:[#allocation11 + $0x58] sm:$0xf]
    %v816 = vld [vmem:[#allocation11 + $0x5c] sm:$0xf]
    %v817 = vld [vmem:[#allocation11 + $0x60] sm:$0xf]
    %v818 = vld [vmem:[#allocation11 + $0x64] sm:$0xf]
    %v819 = vld [vmem:[#allocation11 + $0x68] sm:$0xf]
    %v820 = vld [vmem:[#allocation11 + $0x6c] sm:$0xf]
    %v821 = vld [vmem:[#allocation11 + $0x70] sm:$0xf]
    %v822 = vld [vmem:[#allocation11 + $0x74] sm:$0xf]
    %v823 = vld [vmem:[#allocation11 + $0x78] sm:$0xf]
    %v824 = vld [vmem:[#allocation11 + $0x7c] sm:$0xf]
    %v825 = vlaneseq
    %v826 = vshrl.u32 %v825, 7
    %v827 = vsub.s32 0, %v826
    %v828 = vrot.slane %v284, %v827
    %v861 = vunpack.c.l.b16 %v793
    %v862 = vunpack.c.l.b16 %v794
    %v863 = vunpack.c.l.b16 %v795
    %v864 = vunpack.c.l.b16 %v796
    %v865 = vunpack.c.l.b16 %v797
    %v866 = vunpack.c.l.b16 %v798
    %v867 = vunpack.c.l.b16 %v799
    %v868 = vunpack.c.l.b16 %v800
    %v869 = vunpack.c.l.b16 %v801
    %v870 = vunpack.c.l.b16 %v802
    %v871 = vunpack.c.l.b16 %v803
    %v872 = vunpack.c.l.b16 %v804
    %v873 = vunpack.c.l.b16 %v805
    %v874 = vunpack.c.l.b16 %v806
    %v875 = vunpack.c.l.b16 %v807
    %v876 = vunpack.c.l.b16 %v808
    %v877 = vunpack.c.l.b16 %v809
    %v878 = vunpack.c.l.b16 %v810
    %v879 = vunpack.c.l.b16 %v811
    %v880 = vunpack.c.l.b16 %v812
    %v881 = vunpack.c.l.b16 %v813
    %v882 = vunpack.c.l.b16 %v814
    %v883 = vunpack.c.l.b16 %v815
    %v884 = vunpack.c.l.b16 %v816
    %v885 = vunpack.c.l.b16 %v817
    %v886 = vunpack.c.l.b16 %v818
    %v887 = vunpack.c.l.b16 %v819
    %v888 = vunpack.c.l.b16 %v820
    %v889 = vunpack.c.l.b16 %v821
    %v890 = vunpack.c.l.b16 %v822
    %v891 = vunpack.c.l.b16 %v823
    %v892 = vunpack.c.l.b16 %v824
    %v893 = vpack.c.b16 %v862, %v861
    %v894 = vpack.c.b16 %v864, %v863
    %v895 = vpack.c.b16 %v866, %v865
    %v896 = vpack.c.b16 %v868, %v867
    %v897 = vpack.c.b16 %v870, %v869
    %v898 = vpack.c.b16 %v872, %v871
    %v899 = vpack.c.b16 %v874, %v873
    %v900 = vpack.c.b16 %v876, %v875
    %v901 = vpack.c.b16 %v878, %v877
    %v902 = vpack.c.b16 %v880, %v879
    %v903 = vpack.c.b16 %v882, %v881
    %v904 = vpack.c.b16 %v884, %v883
    %v905 = vpack.c.b16 %v886, %v885
    %v906 = vpack.c.b16 %v888, %v887
    %v907 = vpack.c.b16 %v890, %v889
    %v908 = vpack.c.b16 %v892, %v891
    %925 = vmatprep.subr.bf16.mxu0 0
    %926 = vmatpush1.bf16.msra.mxu0 %v893
    %927 = vmatprep.subr.bf16.mxu0 0
    %928 = vmatpush1.bf16.msra.mxu0 %v894
    %929 = vmatprep.subr.bf16.mxu0 0
    %930 = vmatpush1.bf16.msra.mxu0 %v895
    %931 = vmatprep.subr.bf16.mxu0 0
    %932 = vmatpush1.bf16.msra.mxu0 %v896
    %933 = vmatprep.subr.bf16.mxu0 0
    %934 = vmatpush1.bf16.msra.mxu0 %v897
    %935 = vmatprep.subr.bf16.mxu0 0
    %936 = vmatpush1.bf16.msra.mxu0 %v898
    %937 = vmatprep.subr.bf16.mxu0 0
    %938 = vmatpush1.bf16.msra.mxu0 %v899
    %939 = vmatprep.subr.bf16.mxu0 0
    %940 = vmatpush1.bf16.msra.mxu0 %v900
    %941 = vmatprep.subr.bf16.mxu0 0
    %942 = vmatpush1.bf16.msra.mxu0 %v901
    %943 = vmatprep.subr.bf16.mxu0 0
    %944 = vmatpush1.bf16.msra.mxu0 %v902
    %945 = vmatprep.subr.bf16.mxu0 0
    %946 = vmatpush1.bf16.msra.mxu0 %v903
    %947 = vmatprep.subr.bf16.mxu0 0
    %948 = vmatpush1.bf16.msra.mxu0 %v904
    %949 = vmatprep.subr.bf16.mxu0 0
    %950 = vmatpush1.bf16.msra.mxu0 %v905
    %951 = vmatprep.subr.bf16.mxu0 0
    %952 = vmatpush1.bf16.msra.mxu0 %v906
    %953 = vmatprep.subr.bf16.mxu0 0
    %954 = vmatpush1.bf16.msra.mxu0 %v907
    %955 = vmatprep.subr.bf16.mxu0 0
    %956 = vmatpush1.bf16.msra.mxu0 %v908
    %957 = vmatprep.mubr.bf16.mxu0 %v792
    %958 = vmatmul.mubr.bf16.gmra.mrb[0].mxu0 %v791
    %v959 = vpop.f32.mrb[0].mxu0
    %v960 = vadd.f32 %v828, %v959
    %v961 = vpop.f32.mrb[0].mxu0
    %v962 = vpop.f32.mrb[0].mxu0
    %v963 = vpop.f32.mrb[0].mxu0
    %964 = vdwg.mxu0
    %v965 = vpack.c.bf16 %v960, %v960
    %966 = vst [vmem:[#allocation14] sm:$0xf] %v965
    // Predicated region
    $region58: #{_forward_impl.1} parent=1 // pred_check
      _
    $region59: #{_forward_impl.1} parent=1 // pred_check_branch
      %968 = sbr.rel (0) target = $region61
    $region60: #{_forward_impl.1} parent=1 // pred_region
      %s970 = ssub.s32 64, 64
      %971 = vsyncadd [#allocation4], %s970
      %s973 = sshll.u32 [#allocation14], 4
      %s974 = int_to_ptr.vmem [resolvable:$true] %s973
      %976 = dma.vmem_to_hbm [thread:$0]  %s974, 64, %s7, [#allocation4]
    $region61: #{_forward_impl.1} parent=1 // pred_fallthru
      _
    // Predicated region
    $region62: #{_forward_impl.1} parent=1 // pred_check
      _
    $region63: #{_forward_impl.1} parent=1 // pred_check_branch
      %978 = sbr.rel (0) target = $region65
    $region64: #{_forward_impl.1} parent=1 // pred_region
      %979 = dma.done [#allocation4], 64
    $region65: #{_forward_impl.1} parent=1 // pred_fallthru
      _
    %980 = vsyncpa [#allocation3], 1
    %981 = vsyncpa [#allocation6], 1
    %982 = vsyncpa [#allocation9], 1
    %983 = vsyncpa [#allocation12], 1
    %984 = vsyncpa [#allocation4], 1

</llo_original>
